<compile_context>
chip_gen: v7x
topology: tpu7x:2x2x1
jax: 0.10.0
libtpu: 0.0.40
codegen_flags: <defaults>
</compile_context>

<pallas_src>
import functools

import numpy as np
import jax
import jax.numpy as jnp
from jax import lax
from jax.experimental import pallas as pl
from jax.experimental.pallas import tpu as pltpu


# ----------------------------------------------------------------------------
# helpers
# ----------------------------------------------------------------------------
def _round_up(x, m):
    return ((x + m - 1) // m) * m


def _prepare(dis, lens):
    """View `dis` as a lane-friendly 2-D (rows, cols) array + per-row lengths.

    Returns (data2d, row_lens(NR,1) int32, W, NC, NR, mask_sum).
    """
    dis = jnp.asarray(dis)
    B = int(dis.shape[0])
    W = int(dis.shape[-1])
    R = 1
    for s in dis.shape[1:-1]:
        R *= int(s)
    R = max(R, 1)
    lens = jnp.asarray(lens, jnp.int32).reshape(B)
    total = B * R * W

    # lane-dense fast path: 128 lanes per row, column index = lane % W
    if W < 128 and 128 % W == 0 and (R * W) % 128 == 0:
        NC = 128
    else:
        NC = W
    NR = total // NC
    reps = NR // B                       # rows per batch element
    data2d = dis.reshape(NR, NC)         # contiguous reshape, no copy
    row_lens = jnp.repeat(lens, reps).reshape(NR, 1)
    # sum(mask) computed analytically (mask[i,:,:,len_i:] = 0)
    mask_sum = float(R) * jnp.sum(
        jnp.clip(lens.astype(jnp.float32), 0.0, float(W)))
    return data2d, row_lens, W, NC, NR, mask_sum


def _tile_params(NR, NC, itemsize, max_rows_per_tile):
    """Pick a large row-tile (target ~2 MB per data block) and the 2-D grid."""
    target_bytes = 2 << 20
    tr = target_bytes // max(1, NC * itemsize)
    tr = max(8, min(int(tr), int(max_rows_per_tile)))
    tr = (tr // 8) * 8
    if NR <= tr:
        tr = NR                          # single full-extent row tile
    n_tiles = -(-NR // tr)
    g0 = 2 if n_tiles >= 2 else 1        # leading "parallel" axis (v7x 2 TCs)
    tpc = -(-n_tiles // g0)              # row tiles per parallel chunk
    return tr, n_tiles, g0, tpc


# ----------------------------------------------------------------------------
# kernels
# ----------------------------------------------------------------------------
def _hinge_term(d_ref, l_ref, col, row_valid, *, sign, use_relu):
    d = d_ref[...].astype(jnp.float32)              # native dtype -> f32 in-reg
    thr = l_ref[...]                                # (tr, 1) int32
    full_mask = jnp.logical_and(col < thr, row_valid)
    d_m = jnp.where(full_mask, d, 0.0)
    if use_relu:
        t = jnp.maximum(1.0 + sign * d_m, 0.0)      # masked-in-range -> relu(1)=1
        return jnp.where(row_valid, t, 0.0)         # rows past data contribute 0
    return d_m


def _single_kernel(l_ref, d_ref, o_ref, *, width, lane_dense, n_rows,
                   tiles_per_chunk, sign, use_relu):
    c = pl.program_id(0)
    j = pl.program_id(1)
    tr, nc = d_ref.shape

    @pl.when(j == 0)
    def _():
        o_ref[...] = jnp.zeros_like(o_ref)

    row0 = (c * tiles_per_chunk + j) * tr
    rows = row0 + lax.broadcasted_iota(jnp.int32, (tr, 1), 0)
    row_valid = rows < n_rows
    col = lax.broadcasted_iota(jnp.int32, (tr, nc), 1)
    if lane_dense:                                   # width is a power of two
        col = jnp.bitwise_and(col, width - 1)
    o_ref[...] += _hinge_term(d_ref, l_ref, col, row_valid,
                              sign=sign, use_relu=use_relu)


def _pair_kernel(lr_ref, lf_ref, dr_ref, df_ref, or_ref, of_ref, *,
                 width, lane_dense, n_rows, tiles_per_chunk):
    c = pl.program_id(0)
    j = pl.program_id(1)
    tr, nc = dr_ref.shape

    @pl.when(j == 0)
    def _():
        or_ref[...] = jnp.zeros_like(or_ref)
        of_ref[...] = jnp.zeros_like(of_ref)

    row0 = (c * tiles_per_chunk + j) * tr
    rows = row0 + lax.broadcasted_iota(jnp.int32, (tr, 1), 0)
    row_valid = rows < n_rows
    col = lax.broadcasted_iota(jnp.int32, (tr, nc), 1)
    if lane_dense:
        col = jnp.bitwise_and(col, width - 1)
    or_ref[...] += _hinge_term(dr_ref, lr_ref, col, row_valid,
                               sign=-1.0, use_relu=True)
    of_ref[...] += _hinge_term(df_ref, lf_ref, col, row_valid,
                               sign=+1.0, use_relu=True)


# ----------------------------------------------------------------------------
# wrappers around pallas_call
# ----------------------------------------------------------------------------
def _masked_sum(dis, lens, *, sign, use_relu, max_rows_per_tile=2048):
    """sum(term) over the whole tensor, plus analytic sum(mask)."""
    data, row_lens, W, NC, NR, mask_sum = _prepare(dis, lens)
    tr, n_tiles, g0, tpc = _tile_params(NR, NC, data.dtype.itemsize,
                                        max_rows_per_tile)
    lane_dense = (NC != W)
    idx = lambda c, j: (jnp.minimum(c * tpc + j, n_tiles - 1), 0)

    kernel = functools.partial(
        _single_kernel, width=W, lane_dense=lane_dense, n_rows=NR,
        tiles_per_chunk=tpc, sign=sign, use_relu=use_relu)
    partial = pl.pallas_call(
        kernel,
        out_shape=jax.ShapeDtypeStruct((g0, tr, NC), jnp.float32),
        grid=(g0, tpc),
        in_specs=[pl.BlockSpec((tr, 1), idx),        # per-row lengths
                  pl.BlockSpec((tr, NC), idx)],      # data tile
        out_specs=pl.BlockSpec((None, tr, NC), lambda c, j: (c, 0, 0)),
        compiler_params=pltpu.CompilerParams(
            dimension_semantics=("parallel", "arbitrary")),
    )(row_lens, data)
    return jnp.sum(partial), mask_sum


def _masked_sums_pair(dis_r, lens_r, dis_f, lens_f, *, max_rows_per_tile=2048):
    """Fused real+fake hinge sums in a single pallas_call (same-shape inputs)."""
    dr, lr, Wr, NCr, NRr, ms_r = _prepare(dis_r, lens_r)
    df, lf, Wf, NCf, NRf, ms_f = _prepare(dis_f, lens_f)

    if dr.shape != df.shape or dr.dtype != df.dtype or Wr != Wf:
        # shapes differ -> fall back to two single-tensor launches
        sr, _ = _masked_sum(dis_r, lens_r, sign=-1.0, use_relu=True,
                            max_rows_per_tile=max_rows_per_tile)
        sf, _ = _masked_sum(dis_f, lens_f, sign=+1.0, use_relu=True,
                            max_rows_per_tile=max_rows_per_tile)
        return sr, ms_r, sf, ms_f

    W, NC, NR = Wr, NCr, NRr
    tr, n_tiles, g0, tpc = _tile_params(NR, NC, dr.dtype.itemsize,
                                        max_rows_per_tile)
    lane_dense = (NC != W)
    idx = lambda c, j: (jnp.minimum(c * tpc + j, n_tiles - 1), 0)

    kernel = functools.partial(
        _pair_kernel, width=W, lane_dense=lane_dense, n_rows=NR,
        tiles_per_chunk=tpc)
    out_r, out_f = pl.pallas_call(
        kernel,
        out_shape=(jax.ShapeDtypeStruct((g0, tr, NC), jnp.float32),
                   jax.ShapeDtypeStruct((g0, tr, NC), jnp.float32)),
        grid=(g0, tpc),
        in_specs=[pl.BlockSpec((tr, 1), idx),
                  pl.BlockSpec((tr, 1), idx),
                  pl.BlockSpec((tr, NC), idx),
                  pl.BlockSpec((tr, NC), idx)],
        out_specs=(pl.BlockSpec((None, tr, NC), lambda c, j: (c, 0, 0)),
                   pl.BlockSpec((None, tr, NC), lambda c, j: (c, 0, 0))),
        compiler_params=pltpu.CompilerParams(
            dimension_semantics=("parallel", "arbitrary")),
    )(lr, lf, dr, df)
    return jnp.sum(out_r), ms_r, jnp.sum(out_f), ms_f


# ----------------------------------------------------------------------------
# hinge losses (exact semantics of the PyTorch reference, including the fact
# that masked-out positions of relu(1 - d*m) still contribute relu(1) = 1)
# ----------------------------------------------------------------------------
def loss_hinge_dis(dis_fake, dis_real, len_text_fake, len_text, mask_loss,
                   max_rows_per_tile=2048):
    dis_fake = jnp.asarray(dis_fake)
    dis_real = jnp.asarray(dis_real)
    apply_mask = bool(mask_loss) and dis_fake.ndim > 2
    Br, Wr = int(dis_real.shape[0]), int(dis_real.shape[-1])
    Bf, Wf = int(dis_fake.shape[0]), int(dis_fake.shape[-1])
    lens_real = (jnp.asarray(len_text, jnp.int32) if apply_mask
                 else jnp.full((Br,), Wr, jnp.int32))
    lens_fake = (jnp.asarray(len_text_fake, jnp.int32) if apply_mask
                 else jnp.full((Bf,), Wf, jnp.int32))
    s_r, m_r, s_f, m_f = _masked_sums_pair(
        dis_real, lens_real, dis_fake, lens_fake,
        max_rows_per_tile=max_rows_per_tile)
    return s_r / m_r, s_f / m_f


def loss_hinge_gen(dis_fake, len_text_fake, mask_loss, max_rows_per_tile=2048):
    dis_fake = jnp.asarray(dis_fake)
    apply_mask = bool(mask_loss) and dis_fake.ndim > 2
    B, W = int(dis_fake.shape[0]), int(dis_fake.shape[-1])
    lens = (jnp.asarray(len_text_fake, jnp.int32) if apply_mask
            else jnp.full((B,), W, jnp.int32))
    s, m = _masked_sum(dis_fake, lens, sign=+1.0, use_relu=False,
                       max_rows_per_tile=max_rows_per_tile)
    return -s / m


# ----------------------------------------------------------------------------
# Minimal TRGAN-shaped wrapper: mirrors how backward_D / backward_G combine the
# hinge losses (the defined part of the module on this path).
# ----------------------------------------------------------------------------
class TRGAN:
    def __init__(self, batch_size, resolution=16):
        self.epsilon = 1e-07
        self.resolution = resolution
        self.batch_size = batch_size
        # TODO(synk): netG/netD/netOCR/netW/netconverter omitted
        # (architectures not provided in the source module).

    def discriminator_losses(self, dis_fake, dis_real, len_text_fake, len_text):
        loss_real, loss_fake = loss_hinge_dis(
            dis_fake, dis_real, len_text_fake, len_text, True)
        return loss_real, loss_fake, loss_real + loss_fake

    def generator_loss(self, dis_fake, len_text_fake):
        return loss_hinge_gen(dis_fake, len_text_fake, True)


# ----------------------------------------------------------------------------
# pure-numpy reference (mirrors the PyTorch code) for correctness checking
# ----------------------------------------------------------------------------
def _ref_hinge_dis(dis_fake, dis_real, len_text_fake, len_text, mask_loss):
    mr = np.ones(dis_real.shape, np.float64)
    mf = np.ones(dis_fake.shape, np.float64)
    if mask_loss and dis_fake.ndim > 2:
        for i in range(len(len_text)):
            mr[i, ..., int(len_text[i]):] = 0.0
            mf[i, ..., int(len_text_fake[i]):] = 0.0
    lr = np.sum(np.maximum(1.0 - dis_real * mr, 0.0)) / np.sum(mr)
    lf = np.sum(np.maximum(1.0 + dis_fake * mf, 0.0)) / np.sum(mf)
    return lr, lf


def _ref_hinge_gen(dis_fake, len_text_fake, mask_loss):
    mf = np.ones(dis_fake.shape, np.float64)
    if mask_loss and dis_fake.ndim > 2:
        for i in range(len(len_text_fake)):
            mf[i, ..., int(len_text_fake[i]):] = 0.0
    return -np.sum(dis_fake * mf) / np.sum(mf)


def _run_case(dis_real, dis_fake, len_text, len_text_fake, *, mask_loss=True,
              max_rows_per_tile=2048, tol=1e-5):
    lr, lf = loss_hinge_dis(dis_fake, dis_real, len_text_fake, len_text,
                            mask_loss, max_rows_per_tile=max_rows_per_tile)
    lg = loss_hinge_gen(dis_fake, len_text_fake, mask_loss,
                        max_rows_per_tile=max_rows_per_tile)
    jax.block_until_ready((lr, lf, lg))

    dr = np.asarray(dis_real.astype(jnp.float32), dtype=np.float64)
    df = np.asarray(dis_fake.astype(jnp.float32), dtype=np.float64)
    lt = np.asarray(len_text)
    ltf = np.asarray(len_text_fake)
    lr_ref, lf_ref = _ref_hinge_dis(df, dr, ltf, lt, mask_loss)
    lg_ref = _ref_hinge_gen(df, ltf, mask_loss)

    np.testing.assert_allclose(np.asarray(lr), lr_ref, rtol=tol, atol=tol)
    np.testing.assert_allclose(np.asarray(lf), lf_ref, rtol=tol, atol=tol)
    np.testing.assert_allclose(np.asarray(lg), lg_ref, rtol=tol, atol=tol)


if __name__ == "__main__":
    keys = iter(jax.random.split(jax.random.PRNGKey(0), 16))

    # 1) lane-dense fast path, fused real/fake kernel, single row tile
    B, C, H, W = 2, 1, 8, 16
    dis_real = jax.random.normal(next(keys), (B, C, H, W), jnp.float32)
    dis_fake = jax.random.normal(next(keys), (B, C, H, W), jnp.float32)
    _run_case(dis_real, dis_fake,
              jnp.array([12, 7], jnp.int32), jnp.array([5, 16], jnp.int32))

    # 2) multiple row tiles + 2-chunk parallel axis + partial last tile
    #    (also exercises len == 0 and len > W)
    B, C, H, W = 5, 2, 8, 16
    dis_real = jax.random.normal(next(keys), (B, C, H, W), jnp.float32)
    dis_fake = jax.random.normal(next(keys), (B, C, H, W), jnp.float32)
    _run_case(dis_real, dis_fake,
              jnp.array([3, 16, 0, 9, 20], jnp.int32),
              jnp.array([1, 8, 16, 4, 11], jnp.int32),
              max_rows_per_tile=8)

    # 3) bf16 inputs (native-dtype HBM reads, f32 compute in-kernel)
    B, C, H, W = 2, 1, 8, 16
    dis_real = jax.random.normal(next(keys), (B, C, H, W),
                                 jnp.float32).astype(jnp.bfloat16)
    dis_fake = jax.random.normal(next(keys), (B, C, H, W),
                                 jnp.float32).astype(jnp.bfloat16)
    _run_case(dis_real, dis_fake,
              jnp.array([12, 7], jnp.int32), jnp.array([5, 16], jnp.int32),
              tol=1e-4)

    # 4) fallback layout: W does not divide 128
    B, C, H, W = 2, 3, 4, 24
    dis_real = jax.random.normal(next(keys), (B, C, H, W), jnp.float32)
    dis_fake = jax.random.normal(next(keys), (B, C, H, W), jnp.float32)
    _run_case(dis_real, dis_fake,
              jnp.array([10, 24], jnp.int32), jnp.array([0, 17], jnp.int32))

    # 5) real/fake shapes differ -> unfused single-tensor kernels
    dis_real = jax.random.normal(next(keys), (2, 1, 8, 16), jnp.float32)
    dis_fake = jax.random.normal(next(keys), (2, 1, 4, 16), jnp.float32)
    _run_case(dis_real, dis_fake,
              jnp.array([12, 7], jnp.int32), jnp.array([5, 16], jnp.int32))

    # TRGAN-shaped wrapper smoke test (mirrors backward_D / backward_G usage)
    model = TRGAN(batch_size=2, resolution=16)
    dis_real = jax.random.normal(next(keys), (2, 1, 8, 16), jnp.float32)
    dis_fake = jax.random.normal(next(keys), (2, 1, 8, 16), jnp.float32)
    l_real, l_fake, l_D = model.discriminator_losses(
        dis_fake, dis_real,
        jnp.array([5, 16], jnp.int32), jnp.array([12, 7], jnp.int32))
    l_G = model.generator_loss(dis_fake, jnp.array([5, 16], jnp.int32))
    jax.block_until_ready((l_real, l_fake, l_D, l_G))

    print("KERNEL_OK")
</pallas_src>

<mosaic_0001>
module attributes {stable_mosaic.version = 11 : i64} {
  func.func @_pair_kernel(%arg0: i32, %arg1: i32, %arg2: memref<2x1xi32, #tpu.memory_space<vmem>>, %arg3: memref<2x1xi32, #tpu.memory_space<vmem>>, %arg4: memref<2x128xf32, #tpu.memory_space<vmem>>, %arg5: memref<2x128xf32, #tpu.memory_space<vmem>>, %arg6: memref<1x2x128xf32, #tpu.memory_space<vmem>>, %arg7: memref<1x2x128xf32, #tpu.memory_space<vmem>>) attributes {dimension_semantics = [#tpu.dimension_semantics<parallel>, #tpu.dimension_semantics<arbitrary>], iteration_bounds = array<i64: 1, 1>, scalar_prefetch = 0 : i64, scratch_operands = 0 : i64, tpu.core_type = #tpu.core_type<tc>, window_params = [{transform_indices = @transform_0, window_bounds = array<i64: 2, 1>}, {transform_indices = @transform_1, window_bounds = array<i64: 2, 1>}, {transform_indices = @transform_2, window_bounds = array<i64: 2, 128>}, {transform_indices = @transform_3, window_bounds = array<i64: 2, 128>}, {transform_indices = @transform_4, window_bounds = array<i64: 1, 2, 128>}, {transform_indices = @transform_5, window_bounds = array<i64: 1, 2, 128>}]} {
    %c0_i32 = arith.constant 0 : i32
    %0 = arith.cmpi eq, %arg1, %c0_i32 : i32
    %1 = arith.extui %0 : i1 to i32
    %c0_i32_0 = arith.constant 0 : i32
    %2 = arith.cmpi ne, %1, %c0_i32_0 : i32
    scf.if %2 {
      %cst_30 = arith.constant 0.000000e+00 : f32
      %62 = vector.broadcast %cst_30 : f32 to vector<2x128xf32>
      %c0_31 = arith.constant 0 : index
      %c0_32 = arith.constant 0 : index
      %c0_33 = arith.constant 0 : index
      %63 = vector.load %arg6[%c0_31, %c0_32, %c0_33] : memref<1x2x128xf32, #tpu.memory_space<vmem>>, vector<1x2x128xf32>
      %64 = vector.shape_cast %63 : vector<1x2x128xf32> to vector<2x128xf32>
      %65 = vector.shape_cast %62 : vector<2x128xf32> to vector<1x2x128xf32>
      tpu.vector_store %arg6[%c0_31, %c0_32, %c0_33], %65 {strides = array<i32>} : memref<1x2x128xf32, #tpu.memory_space<vmem>>, vector<1x2x128xf32>,
      %cst_34 = arith.constant 0.000000e+00 : f32
      %66 = vector.broadcast %cst_34 : f32 to vector<2x128xf32>
      %c0_35 = arith.constant 0 : index
      %c0_36 = arith.constant 0 : index
      %c0_37 = arith.constant 0 : index
      %67 = vector.load %arg7[%c0_35, %c0_36, %c0_37] : memref<1x2x128xf32, #tpu.memory_space<vmem>>, vector<1x2x128xf32>
      %68 = vector.shape_cast %67 : vector<1x2x128xf32> to vector<2x128xf32>
      %69 = vector.shape_cast %66 : vector<2x128xf32> to vector<1x2x128xf32>
      tpu.vector_store %arg7[%c0_35, %c0_36, %c0_37], %69 {strides = array<i32>} : memref<1x2x128xf32, #tpu.memory_space<vmem>>, vector<1x2x128xf32>,
    } else {
    }
    %c1_i32 = arith.constant 1 : i32
    %3 = arith.muli %arg0, %c1_i32 : i32
    %4 = arith.addi %3, %arg1 : i32
    %c2_i32 = arith.constant 2 : i32
    %5 = arith.muli %4, %c2_i32 : i32
    %6 = tpu.iota {dimensions = array<i32: 0>} : vector<2x1xi32>
    %7 = vector.broadcast %5 : i32 to vector<2x1xi32>
    %8 = arith.addi %7, %6 : vector<2x1xi32>
    %c2_i32_1 = arith.constant 2 : i32
    %9 = vector.broadcast %c2_i32_1 : i32 to vector<2x1xi32>
    %10 = arith.cmpi slt, %8, %9 : vector<2x1xi32>
    %11 = tpu.iota {dimensions = array<i32: 1>} : vector<2x128xi32>
    %c15_i32 = arith.constant 15 : i32
    %12 = vector.broadcast %c15_i32 : i32 to vector<2x128xi32>
    %13 = arith.andi %11, %12 : vector<2x128xi32>
    %c0 = arith.constant 0 : index
    %c0_2 = arith.constant 0 : index
    %c0_3 = arith.constant 0 : index
    %14 = vector.load %arg6[%c0, %c0_2, %c0_3] : memref<1x2x128xf32, #tpu.memory_space<vmem>>, vector<1x2x128xf32>
    %15 = vector.shape_cast %14 : vector<1x2x128xf32> to vector<2x128xf32>
    %c0_4 = arith.constant 0 : index
    %c0_5 = arith.constant 0 : index
    %16 = vector.load %arg4[%c0_4, %c0_5] : memref<2x128xf32, #tpu.memory_space<vmem>>, vector<2x128xf32>
    %c0_6 = arith.constant 0 : index
    %c0_7 = arith.constant 0 : index
    %17 = vector.load %arg2[%c0_6, %c0_7] : memref<2x1xi32, #tpu.memory_space<vmem>>, vector<2x1xi32>
    %18 = vector.broadcast %17 : vector<2x1xi32> to vector<2x128xi32>
    %19 = arith.cmpi slt, %13, %18 : vector<2x128xi32>
    %20 = vector.broadcast %10 : vector<2x1xi1> to vector<2x128xi1>
    %21 = arith.andi %19, %20 : vector<2x128xi1>
    %cst = arith.constant 0.000000e+00 : f32
    %22 = vector.broadcast %cst : f32 to vector<2x128xf32>
    %23 = arith.select %21, %16, %22 : vector<2x128xi1>, vector<2x128xf32>
    %cst_8 = arith.constant -1.000000e+00 : f32
    %24 = vector.broadcast %cst_8 : f32 to vector<2x128xf32>
    %25 = arith.mulf %24, %23 : vector<2x128xf32>
    %cst_9 = arith.constant 1.000000e+00 : f32
    %26 = vector.broadcast %cst_9 : f32 to vector<2x128xf32>
    %27 = arith.addf %26, %25 : vector<2x128xf32>
    %cst_10 = arith.constant 0.000000e+00 : f32
    %28 = vector.broadcast %cst_10 : f32 to vector<2x128xf32>
    %29 = arith.maximumf %27, %28 : vector<2x128xf32>
    %cst_11 = arith.constant 0.000000e+00 : f32
    %30 = vector.shape_cast %10 : vector<2x1xi1> to vector<2x1xi1>
    %31 = vector.broadcast %30 : vector<2x1xi1> to vector<2x128xi1>
    %32 = vector.broadcast %cst_11 : f32 to vector<2x128xf32>
    %33 = arith.select %31, %29, %32 : vector<2x128xi1>, vector<2x128xf32>
    %34 = arith.addf %15, %33 : vector<2x128xf32>
    %c0_12 = arith.constant 0 : index
    %c0_13 = arith.constant 0 : index
    %c0_14 = arith.constant 0 : index
    %35 = vector.load %arg6[%c0_12, %c0_13, %c0_14] : memref<1x2x128xf32, #tpu.memory_space<vmem>>, vector<1x2x128xf32>
    %36 = vector.shape_cast %35 : vector<1x2x128xf32> to vector<2x128xf32>
    %37 = vector.shape_cast %34 : vector<2x128xf32> to vector<1x2x128xf32>
    tpu.vector_store %arg6[%c0_12, %c0_13, %c0_14], %37 {strides = array<i32>} : memref<1x2x128xf32, #tpu.memory_space<vmem>>, vector<1x2x128xf32>,
    %c0_15 = arith.constant 0 : index
    %c0_16 = arith.constant 0 : index
    %c0_17 = arith.constant 0 : index
    %38 = vector.load %arg7[%c0_15, %c0_16, %c0_17] : memref<1x2x128xf32, #tpu.memory_space<vmem>>, vector<1x2x128xf32>
    %39 = vector.shape_cast %38 : vector<1x2x128xf32> to vector<2x128xf32>
    %c0_18 = arith.constant 0 : index
    %c0_19 = arith.constant 0 : index
    %40 = vector.load %arg5[%c0_18, %c0_19] : memref<2x128xf32, #tpu.memory_space<vmem>>, vector<2x128xf32>
    %c0_20 = arith.constant 0 : index
    %c0_21 = arith.constant 0 : index
    %41 = vector.load %arg3[%c0_20, %c0_21] : memref<2x1xi32, #tpu.memory_space<vmem>>, vector<2x1xi32>
    %42 = vector.broadcast %41 : vector<2x1xi32> to vector<2x128xi32>
    %43 = arith.cmpi slt, %13, %42 : vector<2x128xi32>
    %44 = vector.broadcast %10 : vector<2x1xi1> to vector<2x128xi1>
    %45 = arith.andi %43, %44 : vector<2x128xi1>
    %cst_22 = arith.constant 0.000000e+00 : f32
    %46 = vector.broadcast %cst_22 : f32 to vector<2x128xf32>
    %47 = arith.select %45, %40, %46 : vector<2x128xi1>, vector<2x128xf32>
    %cst_23 = arith.constant 1.000000e+00 : f32
    %48 = vector.broadcast %cst_23 : f32 to vector<2x128xf32>
    %49 = arith.mulf %48, %47 : vector<2x128xf32>
    %cst_24 = arith.constant 1.000000e+00 : f32
    %50 = vector.broadcast %cst_24 : f32 to vector<2x128xf32>
    %51 = arith.addf %50, %49 : vector<2x128xf32>
    %cst_25 = arith.constant 0.000000e+00 : f32
    %52 = vector.broadcast %cst_25 : f32 to vector<2x128xf32>
    %53 = arith.maximumf %51, %52 : vector<2x128xf32>
    %cst_26 = arith.constant 0.000000e+00 : f32
    %54 = vector.shape_cast %10 : vector<2x1xi1> to vector<2x1xi1>
    %55 = vector.broadcast %54 : vector<2x1xi1> to vector<2x128xi1>
    %56 = vector.broadcast %cst_26 : f32 to vector<2x128xf32>
    %57 = arith.select %55, %53, %56 : vector<2x128xi1>, vector<2x128xf32>
    %58 = arith.addf %39, %57 : vector<2x128xf32>
    %c0_27 = arith.constant 0 : index
    %c0_28 = arith.constant 0 : index
    %c0_29 = arith.constant 0 : index
    %59 = vector.load %arg7[%c0_27, %c0_28, %c0_29] : memref<1x2x128xf32, #tpu.memory_space<vmem>>, vector<1x2x128xf32>
    %60 = vector.shape_cast %59 : vector<1x2x128xf32> to vector<2x128xf32>
    %61 = vector.shape_cast %58 : vector<2x128xf32> to vector<1x2x128xf32>
    tpu.vector_store %arg7[%c0_27, %c0_28, %c0_29], %61 {strides = array<i32>} : memref<1x2x128xf32, #tpu.memory_space<vmem>>, vector<1x2x128xf32>,
    return
  }
  func.func @transform_0(%arg0: i32, %arg1: i32) -> (i32, i32) {
    %c1_i32 = arith.constant 1 : i32
    %0 = arith.muli %arg0, %c1_i32 : i32
    %1 = arith.addi %0, %arg1 : i32
    %c0_i32 = arith.constant 0 : i32
    %2 = arith.minsi %1, %c0_i32 : i32
    %c0_i32_0 = arith.constant 0 : i32
    %c0_i32_1 = arith.constant 0 : i32
    return %2, %c0_i32_0 : i32, i32
  }
  func.func @transform_1(%arg0: i32, %arg1: i32) -> (i32, i32) {
    %c1_i32 = arith.constant 1 : i32
    %0 = arith.muli %arg0, %c1_i32 : i32
    %1 = arith.addi %0, %arg1 : i32
    %c0_i32 = arith.constant 0 : i32
    %2 = arith.minsi %1, %c0_i32 : i32
    %c0_i32_0 = arith.constant 0 : i32
    %c0_i32_1 = arith.constant 0 : i32
    return %2, %c0_i32_0 : i32, i32
  }
  func.func @transform_2(%arg0: i32, %arg1: i32) -> (i32, i32) {
    %c1_i32 = arith.constant 1 : i32
    %0 = arith.muli %arg0, %c1_i32 : i32
    %1 = arith.addi %0, %arg1 : i32
    %c0_i32 = arith.constant 0 : i32
    %2 = arith.minsi %1, %c0_i32 : i32
    %c0_i32_0 = arith.constant 0 : i32
    %c0_i32_1 = arith.constant 0 : i32
    return %2, %c0_i32_0 : i32, i32
  }
  func.func @transform_3(%arg0: i32, %arg1: i32) -> (i32, i32) {
    %c1_i32 = arith.constant 1 : i32
    %0 = arith.muli %arg0, %c1_i32 : i32
    %1 = arith.addi %0, %arg1 : i32
    %c0_i32 = arith.constant 0 : i32
    %2 = arith.minsi %1, %c0_i32 : i32
    %c0_i32_0 = arith.constant 0 : i32
    %c0_i32_1 = arith.constant 0 : i32
    return %2, %c0_i32_0 : i32, i32
  }
  func.func @transform_4(%arg0: i32, %arg1: i32) -> (i32, i32, i32) {
    %c0_i32 = arith.constant 0 : i32
    %c0_i32_0 = arith.constant 0 : i32
    %c0_i32_1 = arith.constant 0 : i32
    return %arg0, %c0_i32, %c0_i32_0 : i32, i32, i32
  }
  func.func @transform_5(%arg0: i32, %arg1: i32) -> (i32, i32, i32) {
    %c0_i32 = arith.constant 0 : i32
    %c0_i32_0 = arith.constant 0 : i32
    %c0_i32_1 = arith.constant 0 : i32
    return %arg0, %c0_i32, %c0_i32_0 : i32, i32, i32
  }
}

</mosaic_0001>

<llo_original>
// kernel: tpu_custom_call.1
$region0: #{tpu_custom_call.1}
  #allocation0 [shape = 'u32[]', space=smem, size = 0x4, offset = 0x4, fixed_abs, tag = 'smem constant byte address 0x4 - core index']
  #allocation1 [shape = 'u32[144,128]{1,0:T(1,128)}', space=vmem, size = 0x12000, scoped, tag = 'internal scratch']
  %s0 = inlined_call_operand.vmem [shape: s32[2,1], index: 0, kind: input, shape index: {}]
  %s1 = inlined_call_operand.vmem [shape: s32[2,1], index: 1, kind: input, shape index: {}]
  %s2 = inlined_call_operand.vmem [shape: f32[2,128], index: 2, kind: input, shape index: {}]
  %s3 = inlined_call_operand.vmem [shape: f32[2,128], index: 3, kind: input, shape index: {}]
  %s4 = inlined_call_operand.hbm [shape: f32[1,2,128], index: 4, kind: output, shape index: {0}]
  %s5 = inlined_call_operand.hbm [shape: f32[1,2,128], index: 5, kind: output, shape index: {1}]
  %6 = xla_tuple %s4, %s5
  %s7 = sld [smem:[#allocation0]]
  $region38: #{tpu_custom_call.1} parent=0
    _
  %s9 = ssub.s32 1, %s7
  %s10 = scalar_select 0, %s9, %s7
  $region1: #{tpu_custom_call.1} parent=0
    #allocation2 [shape = 'u8[1024]{0}', space=vmem, size = 0x400, scoped, tag = 'output window, operand 0, single buffered']
    #allocation3 [shape = 's32[1]{0}', space=sflag, size = 0x4, scoped, tag = 'scoped memory for tpu_custom_call.1']
    #allocation4 [shape = 'u8[1024]{0}', space=vmem, size = 0x400, scoped, tag = 'output window, operand 1, single buffered']
    #allocation5 [shape = 's32[1]{0}', space=sflag, size = 0x4, scoped, tag = 'scoped memory for tpu_custom_call.1']
    %11 = vsyncpa [#allocation3], 0
    %12 = vsyncpa [#allocation5], 0
    // Predicated region
    $region2: #{tpu_custom_call.1} parent=1 // pred_check
      _
    $region3: #{tpu_custom_call.1} parent=1 // pred_check_branch
      %14 = sbr.rel (0) target = $region5
    $region4: #{tpu_custom_call.1} parent=1 // pred_region
      %s15 = sadd.s32 0, 0
      %p16 = scmp.lt.s32.totalorder %s15, 0
      %s17 = scalar_select %p16, %s15, 0
      %p18 = scmp.lt.s32.totalorder %s17, 0
      %s19 = scalar_select %p18, %s17, 0
      %s20 = smul.addr %s19, 2
      %s21 = scalar_lea.vmem %s0, %s20
      %s22 = sadd.s32 0, 0
      %p23 = scmp.lt.s32.totalorder %s22, 0
      %s24 = scalar_select %p23, %s22, 0
    $region5: #{tpu_custom_call.1} parent=1 // pred_fallthru
      _
    // Predicated region
    $region6: #{tpu_custom_call.1} parent=1 // pred_check
      _
    $region7: #{tpu_custom_call.1} parent=1 // pred_check_branch
      %26 = sbr.rel (0) target = $region9
    $region8: #{tpu_custom_call.1} parent=1 // pred_region
      %s27 = sadd.s32 0, 0
      %p28 = scmp.lt.s32.totalorder %s27, 0
      %s29 = scalar_select %p28, %s27, 0
      %p30 = scmp.lt.s32.totalorder %s29, 0
      %s31 = scalar_select %p30, %s29, 0
      %s32 = smul.addr %s31, 2
      %s33 = scalar_lea.vmem %s1, %s32
      %s34 = sadd.s32 0, 0
      %p35 = scmp.lt.s32.totalorder %s34, 0
      %s36 = scalar_select %p35, %s34, 0
    $region9: #{tpu_custom_call.1} parent=1 // pred_fallthru
      _
    // Predicated region
    $region10: #{tpu_custom_call.1} parent=1 // pred_check
      _
    $region11: #{tpu_custom_call.1} parent=1 // pred_check_branch
      %38 = sbr.rel (0) target = $region13
    $region12: #{tpu_custom_call.1} parent=1 // pred_region
      %s39 = sadd.s32 0, 0
      %p40 = scmp.lt.s32.totalorder %s39, 0
      %s41 = scalar_select %p40, %s39, 0
      %p42 = scmp.lt.s32.totalorder %s41, 0
      %s43 = scalar_select %p42, %s41, 0
      %s44 = smul.addr %s43, 2
      %s45 = scalar_lea.vmem %s2, %s44
      %s46 = sadd.s32 0, 0
      %p47 = scmp.lt.s32.totalorder %s46, 0
      %s48 = scalar_select %p47, %s46, 0
    $region13: #{tpu_custom_call.1} parent=1 // pred_fallthru
      _
    // Predicated region
    $region14: #{tpu_custom_call.1} parent=1 // pred_check
      _
    $region15: #{tpu_custom_call.1} parent=1 // pred_check_branch
      %50 = sbr.rel (0) target = $region17
    $region16: #{tpu_custom_call.1} parent=1 // pred_region
      %s51 = sadd.s32 0, 0
      %p52 = scmp.lt.s32.totalorder %s51, 0
      %s53 = scalar_select %p52, %s51, 0
      %p54 = scmp.lt.s32.totalorder %s53, 0
      %s55 = scalar_select %p54, %s53, 0
      %s56 = smul.addr %s55, 2
      %s57 = scalar_lea.vmem %s3, %s56
      %s58 = sadd.s32 0, 0
      %p59 = scmp.lt.s32.totalorder %s58, 0
      %s60 = scalar_select %p59, %s58, 0
    $region17: #{tpu_custom_call.1} parent=1 // pred_fallthru
      _
    %s61 = sadd.s32 0, 0
    %p62 = scmp.lt.s32.totalorder %s61, 0
    %s63 = scalar_select %p62, %s61, 0
    %p64 = scmp.lt.s32.totalorder %s63, 0
    %s65 = scalar_select %p64, %s63, 0
    %s66 = smul.addr %s65, 2
    %s67 = scalar_lea.vmem %s0, %s66
    %s68 = sadd.s32 0, 0
    %p69 = scmp.lt.s32.totalorder %s68, 0
    %s70 = scalar_select %p69, %s68, 0
    %p71 = scmp.lt.s32.totalorder %s70, 0
    %s72 = scalar_select %p71, %s70, 0
    %s73 = smul.addr %s72, 2
    %s74 = scalar_lea.vmem %s1, %s73
    %s75 = sadd.s32 0, 0
    %p76 = scmp.lt.s32.totalorder %s75, 0
    %s77 = scalar_select %p76, %s75, 0
    %p78 = scmp.lt.s32.totalorder %s77, 0
    %s79 = scalar_select %p78, %s77, 0
    %s80 = smul.addr %s79, 2
    %s81 = scalar_lea.vmem %s2, %s80
    %s82 = sadd.s32 0, 0
    %p83 = scmp.lt.s32.totalorder %s82, 0
    %s84 = scalar_select %p83, %s82, 0
    %p85 = scmp.lt.s32.totalorder %s84, 0
    %s86 = scalar_select %p85, %s84, 0
    %s87 = smul.addr %s86, 2
    %s88 = scalar_lea.vmem %s3, %s87
    %s89 = sadd.s32 0, 0
    %p90 = scmp.lt.s32.totalorder %s89, 0
    %s91 = scalar_select %p90, %s89, 0
    %p92 = scmp.lt.s32.totalorder %s91, 0
    %s93 = scalar_select %p92, %s91, 0
    %s94 = smul.addr %s93, 2
    %s95 = scalar_lea.vmem %s0, %s94
    %s96 = sadd.s32 0, 0
    %p97 = scmp.lt.s32.totalorder %s96, 0
    %s98 = scalar_select %p97, %s96, 0
    %s99 = sadd.s32 0, 0
    %p100 = scmp.lt.s32.totalorder %s99, 0
    %s101 = scalar_select %p100, %s99, 0
    %p102 = scmp.lt.s32.totalorder %s101, 0
    %s103 = scalar_select %p102, %s101, 0
    %s104 = smul.addr %s103, 2
    %s105 = scalar_lea.vmem %s1, %s104
    %s106 = sadd.s32 0, 0
    %p107 = scmp.lt.s32.totalorder %s106, 0
    %s108 = scalar_select %p107, %s106, 0
    %s109 = sadd.s32 0, 0
    %p110 = scmp.lt.s32.totalorder %s109, 0
    %s111 = scalar_select %p110, %s109, 0
    %p112 = scmp.lt.s32.totalorder %s111, 0
    %s113 = scalar_select %p112, %s111, 0
    %s114 = smul.addr %s113, 2
    %s115 = scalar_lea.vmem %s2, %s114
    %s116 = sadd.s32 0, 0
    %p117 = scmp.lt.s32.totalorder %s116, 0
    %s118 = scalar_select %p117, %s116, 0
    %s119 = sadd.s32 0, 0
    %p120 = scmp.lt.s32.totalorder %s119, 0
    %s121 = scalar_select %p120, %s119, 0
    %p122 = scmp.lt.s32.totalorder %s121, 0
    %s123 = scalar_select %p122, %s121, 0
    %s124 = smul.addr %s123, 2
    %s125 = scalar_lea.vmem %s3, %s124
    %s126 = sadd.s32 0, 0
    %p127 = scmp.lt.s32.totalorder %s126, 0
    %s128 = scalar_select %p127, %s126, 0
    %p129 = scmp.eq.s32.totalorder 0, 0
    // Predicated region
    $region18: #{tpu_custom_call.1} parent=1 // pred_check
      %p130 = pneg %p129
    $region19: #{tpu_custom_call.1} parent=1 // pred_check_branch
      %132 = sbr.rel (%p130) target = $region21
    $region20: #{tpu_custom_call.1} parent=1 // pred_region
      %133 = vst [vmem:[#allocation2] sm:$0x3] 0.0
      %134 = vst [vmem:[#allocation4] sm:$0x3] 0.0
    $region21: #{tpu_custom_call.1} parent=1 // pred_fallthru
      _
    %s135 = sadd.s32 0, 0
    %s136 = smul.u32 %s135, 2
    %v137 = vlaneseq
    %v138 = vshrl.u32 %v137, 7
    %v139 = vstv %s136
    %v140 = vadd.s32 %v139, %v138
    %vm141 = vcmp.lt.s32.totalorder %v140, 2
    %v142 = vlaneseq
    %v143 = vand.u32 %v142, 127
    %v144 = vand.u32 %v143, 15
    %v145 = vld [vmem:[#allocation2] sm:$0x3]
    %v146 = vld [vmem:[%s115] sm:$0x3]
    %v147 = vld [vmem:[%s95] sm:$0x3]
    %148 = vset.pattern.permute.xlu0 0
    %149 = vperm.xlu0 %148, %v147
    %v150 = vpop.permute.xlu0 %149
    %vm151 = vcmp.lt.s32.totalorder %v144, %v150
    %v152 = vsel %vm141, 1, 0
    %vm153 = vcmp.eq.s32.totalorder %v152, 1
    %vm154 = vmand %vm151, %vm153
    %v155 = vsel %vm154, %v146, 0.0
    %v156 = vmul.f32 %v155, -1.0
    %v157 = vadd.f32 %v156, 1.0
    %v158 = vmax.f32 %v157, 0.0
    %v159 = vsel %vm153, %v158, 0.0
    %v160 = vadd.f32 %v145, %v159
    %161 = vst [vmem:[#allocation2] sm:$0x3] %v160
    %v162 = vld [vmem:[#allocation4] sm:$0x3]
    %v163 = vld [vmem:[%s125] sm:$0x3]
    %v164 = vld [vmem:[%s105] sm:$0x3]
    %165 = vset.pattern.permute.xlu0 0
    %166 = vperm.xlu0 %165, %v164
    %v167 = vpop.permute.xlu0 %166
    %vm168 = vcmp.lt.s32.totalorder %v144, %v167
    %vm169 = vmand %vm168, %vm153
    %v170 = vsel %vm169, %v163, 0.0
    %v171 = vadd.f32 %v170, 1.0
    %v172 = vmax.f32 %v171, 0.0
    %v173 = vsel %vm153, %v172, 0.0
    %v174 = vadd.f32 %v162, %v173
    %175 = vst [vmem:[#allocation4] sm:$0x3] %v174
    // Predicated region
    $region22: #{tpu_custom_call.1} parent=1 // pred_check
      _
    $region23: #{tpu_custom_call.1} parent=1 // pred_check_branch
      %177 = sbr.rel (0) target = $region25
    $region24: #{tpu_custom_call.1} parent=1 // pred_region
      %s179 = ssub.s32 32, 32
      %180 = vsyncadd [#allocation3], %s179
      %s182 = sshll.u32 [#allocation2], 4
      %s183 = int_to_ptr.vmem [resolvable:$true] %s182
      %185 = dma.vmem_to_hbm [thread:$0]  %s183, 32, %s4, [#allocation3]
    $region25: #{tpu_custom_call.1} parent=1 // pred_fallthru
      _
    // Predicated region
    $region26: #{tpu_custom_call.1} parent=1 // pred_check
      _
    $region27: #{tpu_custom_call.1} parent=1 // pred_check_branch
      %187 = sbr.rel (0) target = $region29
    $region28: #{tpu_custom_call.1} parent=1 // pred_region
      %s189 = ssub.s32 32, 32
      %190 = vsyncadd [#allocation5], %s189
      %s192 = sshll.u32 [#allocation4], 4
      %s193 = int_to_ptr.vmem [resolvable:$true] %s192
      %195 = dma.vmem_to_hbm [thread:$0]  %s193, 32, %s5, [#allocation5]
    $region29: #{tpu_custom_call.1} parent=1 // pred_fallthru
      _
    // Predicated region
    $region30: #{tpu_custom_call.1} parent=1 // pred_check
      _
    $region31: #{tpu_custom_call.1} parent=1 // pred_check_branch
      %197 = sbr.rel (0) target = $region33
    $region32: #{tpu_custom_call.1} parent=1 // pred_region
      %198 = dma.done [#allocation3], 32
    $region33: #{tpu_custom_call.1} parent=1 // pred_fallthru
      _
    // Predicated region
    $region34: #{tpu_custom_call.1} parent=1 // pred_check
      _
    $region35: #{tpu_custom_call.1} parent=1 // pred_check_branch
      %200 = sbr.rel (0) target = $region37
    $region36: #{tpu_custom_call.1} parent=1 // pred_region
      %201 = dma.done [#allocation5], 32
    $region37: #{tpu_custom_call.1} parent=1 // pred_fallthru
      _
    %202 = vsyncpa [#allocation3], 1
    %203 = vsyncpa [#allocation5], 1

</llo_original>
